<compile_context>
chip_gen: v6e
topology: v6e:2x2x1
jax: 0.10.0
libtpu: 0.0.40
codegen_flags: <defaults>
</compile_context>

<pallas_src>
import jax
import jax.numpy as jnp
from jax.experimental import pallas as pl
from jax.experimental.pallas import tpu as pltpu


def _make_classifier_kernel(use_mxu_path: bool):
    """Build the kernel body.

    use_mxu_path=True is only selected when TB == 1, so the flatten/unflatten
    reshapes below are unit-dim squeezes/expands (layout-trivial).
    """

    def kernel(x_ref, w_ref, b_ref, lp_ref, s_ref):
        # x_ref:  (TB, L, H)   VMEM (last two dims are the full L, H)
        # w_ref:  (2, H)       VMEM (constant index_map -> resident across steps)
        # b_ref:  (2,)         SMEM (two scalars)
        # lp_ref, s_ref: (TB, 2, L) VMEM, lane-dense along L
        x = x_ref[...]
        TB, L, H = x.shape
        w = w_ref[...]

        if use_mxu_path:
            # Contract H on the MXU: w (2,H) . x (TB*L,H)^T -> (2, TB*L).
            # No (TB,L,H)-sized elementwise temporaries; XLU stays free.
            x2 = x.reshape(TB * L, H)                     # (L, H) since TB == 1
            s = jax.lax.dot_general(
                w.astype(x2.dtype), x2,
                dimension_numbers=(((1,), (1,)), ((), ())),
                preferred_element_type=jnp.float32,
            )                                             # (2, L)
            s0 = s[0:1, :] + b_ref[0]                     # (1, L) == (TB, L)
            s1 = s[1:2, :] + b_ref[1]
        else:
            # Small-block path: VPU multiply + XLU lane reduce.  Blocks are
            # small here, and the ~2 block-sized temporaries are accounted for
            # in the tile budget (3x factor).
            xf = x.astype(jnp.float32)
            w0 = w[0].astype(jnp.float32).reshape(1, 1, H)
            w1 = w[1].astype(jnp.float32).reshape(1, 1, H)
            s0 = jnp.sum(xf * w0, axis=-1) + b_ref[0]     # (TB, L)
            s1 = jnp.sum(xf * w1, axis=-1) + b_ref[1]

        s_ref[:, 0, :] = s0.astype(s_ref.dtype)
        s_ref[:, 1, :] = s1.astype(s_ref.dtype)

        def _logsoftmax_over_l(s):
            # nn.LogSoftmax(dim=1) on (B, L, 2): normalize over the *sequence*
            # axis, independently per (batch element, class).
            m = jnp.max(s, axis=1, keepdims=True)                      # (TB, 1)
            z = s - m
            lse = jnp.log(jnp.sum(jnp.exp(z), axis=1, keepdims=True))  # (TB, 1)
            return z - lse

        lp_ref[:, 0, :] = _logsoftmax_over_l(s0).astype(lp_ref.dtype)
        lp_ref[:, 1, :] = _logsoftmax_over_l(s1).astype(lp_ref.dtype)

    return kernel


def _device_budgets():
    """Per-generation block budget and scoped-VMEM limit.

    v5e/v6e have 128 MiB physical VMEM -> stream bigger blocks (12 MiB budget,
    64 MiB limit).  v7x only has 64 MiB -> keep the conservative 4 MiB budget /
    32 MiB limit.  Falls back to the conservative setting if the hardware
    query is unavailable.
    """
    budget_bytes, vmem_limit = 4 << 20, 32 << 20
    try:
        info = pltpu.get_tpu_info()
        vmem_cap = getattr(info, "vmem_capacity_bytes", 0) or 0
        if vmem_cap >= (100 << 20):          # v5e / v6e class (128 MiB VMEM)
            budget_bytes, vmem_limit = 12 << 20, 64 << 20
    except Exception:
        pass
    return budget_bytes, vmem_limit


def _choose_batch_tile(B, L, H, budget_bytes, itemsize=4):
    """Pick the batch tile TB.

    * sized so the double-buffered x block plus the VPU-path elementwise
      temporaries (~3x the block) stay within `budget_bytes`;
    * capped so the grid has >= min(B, 4) steps: lets ("parallel",) shard the
      grid across v7x's two TensorCores and keeps a next block to prefetch;
    * no multiple-of-8 floor: TB == 1 is legal (x block's last two dims are
      the full (L, H); small-TB output sublane padding is cheap).
    """
    per_batch = max(L * H * itemsize, 1)
    tb = max(1, budget_bytes // (3 * per_batch))
    steps_target = min(B, 4)
    tb = min(tb, pl.cdiv(B, max(steps_target, 1)))
    return max(1, min(tb, B))


def linear_classifier_forward(x, weight, bias):
    """x: (B, L, H) f32/bf16; weight: (2, H) [PyTorch nn.Linear layout]; bias: (2,).

    Returns (log_p, scores):
      log_p:  (B, 2, L) f32 -- log_p[:, 0, :] == log_p1, log_p[:, 1, :] == log_p2
      scores: (B, 2, L) f32 -- lane-dense; jnp.moveaxis(scores, 1, -1) gives the
                               PyTorch (B, L, 2) layout for `shared.y_scores`.
    """
    B, L, H = x.shape
    budget_bytes, vmem_limit = _device_budgets()
    TB = _choose_batch_tile(B, L, H, budget_bytes, itemsize=x.dtype.itemsize)
    grid = (pl.cdiv(B, TB),)

    # MXU contraction path only when its reshapes are layout-trivial (TB == 1,
    # i.e. the large-per-batch-slab regime where it matters most).
    use_mxu_path = (TB == 1)
    kernel = _make_classifier_kernel(use_mxu_path)

    out_sds = jax.ShapeDtypeStruct((B, 2, L), jnp.float32)
    # Block last-two dims (2, L) equal the full array dims -> always legal,
    # lane-dense along L; leading (batch) block dim TB is unconstrained.
    out_spec = pl.BlockSpec((TB, 2, L), lambda b: (b, 0, 0))

    # Advisory cost hint so XLA can overlap the call with surrounding ops.
    flops = 4 * B * L * H + 8 * B * L
    transcendentals = 2 * B * L + 2 * B
    bytes_accessed = (x.dtype.itemsize * B * L * H + 4 * 2 * H + 4 * 2
                      + 2 * (4 * 2 * B * L))

    lp, scores = pl.pallas_call(
        kernel,
        out_shape=(out_sds, out_sds),
        grid_spec=pltpu.PrefetchScalarGridSpec(
            num_scalar_prefetch=0,
            grid=grid,
            in_specs=[
                pl.BlockSpec((TB, L, H), lambda b: (b, 0, 0)),        # x
                pl.BlockSpec((2, H), lambda b: (0, 0)),               # weight
                pl.BlockSpec(memory_space=pltpu.MemorySpace.SMEM),    # bias
            ],
            out_specs=[out_spec, out_spec],
        ),
        compiler_params=pltpu.CompilerParams(
            dimension_semantics=("parallel",),
            vmem_limit_bytes=vmem_limit,
        ),
        cost_estimate=pl.CostEstimate(
            flops=flops,
            transcendentals=transcendentals,
            bytes_accessed=bytes_accessed,
        ),
    )(x, weight, bias)

    return lp, scores


if __name__ == "__main__":
    # Small deterministic shapes: batch=2, concated_l=8, hidden_size=32
    B, L, H = 2, 8, 32
    key = jax.random.PRNGKey(0)
    kx, kw, kb = jax.random.split(key, 3)

    x = jax.random.normal(kx, (B, L, H), dtype=jnp.float32)
    # nn.Linear(hidden_size, 2): weight (2, H), bias (2,)
    weight = jax.random.normal(kw, (2, H), dtype=jnp.float32) * 0.1
    bias = jax.random.normal(kb, (2,), dtype=jnp.float32) * 0.1

    log_p, scores = linear_classifier_forward(x, weight, bias)
    log_p1 = log_p[:, 0, :]                 # the module's return values
    log_p2 = log_p[:, 1, :]
    y_scores = jnp.moveaxis(scores, 1, -1)  # (B, L, 2) bookkeeping copy
    jax.block_until_ready((log_p1, log_p2, y_scores))

    # Pure-JAX reference check.
    scores_ref = jnp.einsum("blh,ch->blc", x, weight,
                            precision=jax.lax.Precision.HIGHEST) + bias
    logp_ref = jax.nn.log_softmax(scores_ref, axis=1)

    # The in-kernel f32 MXU contraction may use a multi-pass bf16 decomposition;
    # 2e-3 is still far tighter than any wrong-axis/wrong-op failure mode (O(1)).
    tol = dict(atol=2e-3, rtol=2e-3)
    assert jnp.allclose(y_scores, scores_ref, **tol)
    assert jnp.allclose(log_p1, logp_ref[:, :, 0], **tol)
    assert jnp.allclose(log_p2, logp_ref[:, :, 1], **tol)

    print("KERNEL_OK")
</pallas_src>

<mosaic_0001>
module attributes {stable_mosaic.version = 11 : i64} {
  func.func @kernel(%arg0: i32, %arg1: memref<1x8x32xf32, #tpu.memory_space<vmem>>, %arg2: memref<2x32xf32, #tpu.memory_space<vmem>>, %arg3: memref<2xf32, #tpu.memory_space<smem>>, %arg4: memref<1x2x8xf32, #tpu.memory_space<vmem>>, %arg5: memref<1x2x8xf32, #tpu.memory_space<vmem>>) attributes {dimension_semantics = [#tpu.dimension_semantics<parallel>], iteration_bounds = array<i64: 2>, scalar_prefetch = 0 : i64, scratch_operands = 0 : i64, tpu.core_type = #tpu.core_type<tc>, window_params = [{transform_indices = @transform_0, window_bounds = array<i64: 1, 8, 32>}, {pipeline_mode = #tpu.pipeline_mode<synchronous>, transform_indices = @transform_1, window_bounds = array<i64: 2, 32>}, {transform_indices = @transform_2, window_bounds = array<i64: 2>}, {transform_indices = @transform_3, window_bounds = array<i64: 1, 2, 8>}, {transform_indices = @transform_4, window_bounds = array<i64: 1, 2, 8>}]} {
    %c0 = arith.constant 0 : index
    %c0_0 = arith.constant 0 : index
    %c0_1 = arith.constant 0 : index
    %0 = vector.load %arg1[%c0, %c0_0, %c0_1] : memref<1x8x32xf32, #tpu.memory_space<vmem>>, vector<1x8x32xf32>
    %c0_2 = arith.constant 0 : index
    %c0_3 = arith.constant 0 : index
    %1 = vector.load %arg2[%c0_2, %c0_3] : memref<2x32xf32, #tpu.memory_space<vmem>>, vector<2x32xf32>
    %2 = vector.shape_cast %0 : vector<1x8x32xf32> to vector<8x32xf32>
    %cst = arith.constant dense<0.000000e+00> : vector<2x8xf32>
    %3 = tpu.matmul %1, %2, %cst {dimension_numbers = #tpu.dot_dimension_numbers<[1], [1], [0], [0], [0, 0, 1, 0], [], []>} : vector<2x32xf32>, vector<8x32xf32>, vector<2x8xf32> -> vector<2x8xf32>
    %4 = vector.extract_strided_slice %3 {offsets = [0, 0], sizes = [1, 8], strides = [1, 1]} : vector<2x8xf32> to vector<1x8xf32>
    %c0_4 = arith.constant 0 : index
    %5 = memref.load %arg3[%c0_4] : memref<2xf32, #tpu.memory_space<smem>>
    %6 = vector.broadcast %5 : f32 to vector<1x8xf32>
    %7 = arith.addf %4, %6 : vector<1x8xf32>
    %8 = vector.extract_strided_slice %3 {offsets = [1, 0], sizes = [1, 8], strides = [1, 1]} : vector<2x8xf32> to vector<1x8xf32>
    %c1 = arith.constant 1 : index
    %9 = memref.load %arg3[%c1] : memref<2xf32, #tpu.memory_space<smem>>
    %10 = vector.broadcast %9 : f32 to vector<1x8xf32>
    %11 = arith.addf %8, %10 : vector<1x8xf32>
    %c0_5 = arith.constant 0 : index
    %c0_6 = arith.constant 0 : index
    %c0_7 = arith.constant 0 : index
    %12 = vector.load %arg5[%c0_5, %c0_6, %c0_7] : memref<1x2x8xf32, #tpu.memory_space<vmem>>, vector<1x1x8xf32>
    %13 = vector.shape_cast %12 : vector<1x1x8xf32> to vector<1x8xf32>
    %14 = vector.shape_cast %7 : vector<1x8xf32> to vector<1x1x8xf32>
    tpu.vector_store %arg5[%c0_5, %c0_6, %c0_7], %14 {strides = array<i32>} : memref<1x2x8xf32, #tpu.memory_space<vmem>>, vector<1x1x8xf32>,
    %c0_8 = arith.constant 0 : index
    %c1_9 = arith.constant 1 : index
    %c0_10 = arith.constant 0 : index
    %15 = vector.load %arg5[%c0_8, %c1_9, %c0_10] : memref<1x2x8xf32, #tpu.memory_space<vmem>>, vector<1x1x8xf32>
    %16 = vector.shape_cast %15 : vector<1x1x8xf32> to vector<1x8xf32>
    %17 = vector.shape_cast %11 : vector<1x8xf32> to vector<1x1x8xf32>
    tpu.vector_store %arg5[%c0_8, %c1_9, %c0_10], %17 {strides = array<i32>} : memref<1x2x8xf32, #tpu.memory_space<vmem>>, vector<1x1x8xf32>,
    %cst_11 = arith.constant dense<0xFF800000> : vector<1xf32>
    %18 = vector.multi_reduction <maximumf>, %7, %cst_11 [1] : vector<1x8xf32> to vector<1xf32>
    %19 = vector.shape_cast %18 : vector<1xf32> to vector<1x1xf32>
    %20 = vector.broadcast %19 : vector<1x1xf32> to vector<1x8xf32>
    %21 = arith.subf %7, %20 : vector<1x8xf32>
    %22 = math.exp %21 : vector<1x8xf32>
    %cst_12 = arith.constant dense<0.000000e+00> : vector<1xf32>
    %23 = vector.multi_reduction <add>, %22, %cst_12 [1] : vector<1x8xf32> to vector<1xf32>
    %24 = vector.shape_cast %23 : vector<1xf32> to vector<1x1xf32>
    %25 = math.log %24 : vector<1x1xf32>
    %26 = vector.broadcast %25 : vector<1x1xf32> to vector<1x8xf32>
    %27 = arith.subf %21, %26 : vector<1x8xf32>
    %c0_13 = arith.constant 0 : index
    %c0_14 = arith.constant 0 : index
    %c0_15 = arith.constant 0 : index
    %28 = vector.load %arg4[%c0_13, %c0_14, %c0_15] : memref<1x2x8xf32, #tpu.memory_space<vmem>>, vector<1x1x8xf32>
    %29 = vector.shape_cast %28 : vector<1x1x8xf32> to vector<1x8xf32>
    %30 = vector.shape_cast %27 : vector<1x8xf32> to vector<1x1x8xf32>
    tpu.vector_store %arg4[%c0_13, %c0_14, %c0_15], %30 {strides = array<i32>} : memref<1x2x8xf32, #tpu.memory_space<vmem>>, vector<1x1x8xf32>,
    %cst_16 = arith.constant dense<0xFF800000> : vector<1xf32>
    %31 = vector.multi_reduction <maximumf>, %11, %cst_16 [1] : vector<1x8xf32> to vector<1xf32>
    %32 = vector.shape_cast %31 : vector<1xf32> to vector<1x1xf32>
    %33 = vector.broadcast %32 : vector<1x1xf32> to vector<1x8xf32>
    %34 = arith.subf %11, %33 : vector<1x8xf32>
    %35 = math.exp %34 : vector<1x8xf32>
    %cst_17 = arith.constant dense<0.000000e+00> : vector<1xf32>
    %36 = vector.multi_reduction <add>, %35, %cst_17 [1] : vector<1x8xf32> to vector<1xf32>
    %37 = vector.shape_cast %36 : vector<1xf32> to vector<1x1xf32>
    %38 = math.log %37 : vector<1x1xf32>
    %39 = vector.broadcast %38 : vector<1x1xf32> to vector<1x8xf32>
    %40 = arith.subf %34, %39 : vector<1x8xf32>
    %c0_18 = arith.constant 0 : index
    %c1_19 = arith.constant 1 : index
    %c0_20 = arith.constant 0 : index
    %41 = vector.load %arg4[%c0_18, %c1_19, %c0_20] : memref<1x2x8xf32, #tpu.memory_space<vmem>>, vector<1x1x8xf32>
    %42 = vector.shape_cast %41 : vector<1x1x8xf32> to vector<1x8xf32>
    %43 = vector.shape_cast %40 : vector<1x8xf32> to vector<1x1x8xf32>
    tpu.vector_store %arg4[%c0_18, %c1_19, %c0_20], %43 {strides = array<i32>} : memref<1x2x8xf32, #tpu.memory_space<vmem>>, vector<1x1x8xf32>,
    return
  }
  func.func @transform_0(%arg0: i32) -> (i32, i32, i32) {
    %c0_i32 = arith.constant 0 : i32
    %c0_i32_0 = arith.constant 0 : i32
    %c0_i32_1 = arith.constant 0 : i32
    return %arg0, %c0_i32, %c0_i32_0 : i32, i32, i32
  }
  func.func @transform_1(%arg0: i32) -> (i32, i32) {
    %c0_i32 = arith.constant 0 : i32
    %c0_i32_0 = arith.constant 0 : i32
    %c0_i32_1 = arith.constant 0 : i32
    return %c0_i32, %c0_i32_0 : i32, i32
  }
  func.func @transform_2(%arg0: i32) -> i32 {
    %c0_i32 = arith.constant 0 : i32
    %c0_i32_0 = arith.constant 0 : i32
    return %c0_i32 : i32
  }
  func.func @transform_3(%arg0: i32) -> (i32, i32, i32) {
    %c0_i32 = arith.constant 0 : i32
    %c0_i32_0 = arith.constant 0 : i32
    %c0_i32_1 = arith.constant 0 : i32
    return %arg0, %c0_i32, %c0_i32_0 : i32, i32, i32
  }
  func.func @transform_4(%arg0: i32) -> (i32, i32, i32) {
    %c0_i32 = arith.constant 0 : i32
    %c0_i32_0 = arith.constant 0 : i32
    %c0_i32_1 = arith.constant 0 : i32
    return %arg0, %c0_i32, %c0_i32_0 : i32, i32, i32
  }
}

</mosaic_0001>

<llo_original>
// kernel: tpu_custom_call.1
$region0: #{tpu_custom_call.1}
  #allocation0 [shape = 'u32[]', space=smem, size = 0x4, offset = 0x4, fixed_abs, tag = 'smem constant byte address 0x4 - core index']
  #allocation1 [shape = 'u32[144,128]{1,0:T(1,128)}', space=vmem, size = 0x12000, scoped, tag = 'internal scratch']
  %s0 = inlined_call_operand.hbm [shape: f32[2,8,32], index: 0, kind: input, shape index: {}]
  %s1 = inlined_call_operand.hbm [shape: f32[2,32], index: 1, kind: input, shape index: {}]
  %s2 = inlined_call_operand.vmem [shape: f32[2], index: 2, kind: input, shape index: {}]
  %s3 = inlined_call_operand.hbm [shape: f32[2,2,8], index: 3, kind: output, shape index: {0}]
  %s4 = inlined_call_operand.hbm [shape: f32[2,2,8], index: 4, kind: output, shape index: {1}]
  %5 = xla_tuple %s3, %s4
  %s6 = sld [smem:[#allocation0]]
  $region65: #{tpu_custom_call.1} parent=0
    _
  %s8 = ssub.s32 1, %s6
  %s9 = scalar_select 0, %s8, %s6
  $region1: #{tpu_custom_call.1} parent=0
    #allocation2 [shape = 'u8[8192]{0}', space=vmem, size = 0x2000, scoped, tag = 'input window, operand 0']
    #allocation3 [shape = 's32[2]{0}', space=sflag, size = 0x8, scoped, tag = 'scoped memory for tpu_custom_call.1']
    #allocation4 [shape = 's32[2]{0}', space=sflag, size = 0x8, scoped, tag = 'scoped memory for tpu_custom_call.1']
    #allocation5 [shape = 's32[2]{0}', space=sflag, size = 0x8, scoped, tag = 'scoped memory for tpu_custom_call.1']
    #allocation6 [shape = 'u8[1024]{0}', space=vmem, size = 0x400, scoped, tag = 'input window, operand 1, single buffered']
    #allocation7 [shape = 's32[1]{0}', space=sflag, size = 0x4, scoped, tag = 'scoped memory for tpu_custom_call.1']
    #allocation8 [shape = 'u8[512]{0}', space=smem, size = 0x200, scoped, tag = 'input window, operand 2, single buffered']
    #allocation9 [shape = 'u8[2048]{0}', space=vmem, size = 0x800, scoped, tag = 'output window, operand 0']
    #allocation10 [shape = 'u8[2048]{0}', space=vmem, size = 0x800, scoped, tag = 'output window, operand 1']
    #allocation11 [shape = 's32[2]{0}', space=sflag, size = 0x8, scoped, tag = 'scoped memory for tpu_custom_call.1']
    %10 = vsyncpa [#allocation3], 0
    %s11 = scalar_lea.sflag [#allocation3], 1
    %12 = vsyncpa %s11, 0
    %13 = vsyncpa [#allocation7], 0
    %14 = vsyncpa [#allocation5], 0
    %15 = vsyncpa [#allocation4], 0
    %s16 = scalar_lea.sflag [#allocation4], 1
    %17 = vsyncpa %s16, 0
    %18 = vsyncpa [#allocation11], 0
    %s19 = scalar_lea.sflag [#allocation11], 1
    %20 = vsyncpa %s19, 0
    loop: start=0, step=1, limit=4
    $region2: #{tpu_custom_call.1} parent=1 // loop_pre_header
      _
    $region3: #{tpu_custom_call.1} parent=1 // loop_header
      %s22 = sphi 0, %s26
      %p23 = scmp.ge.s32.totalorder %s22, 4
      %s32 = sphi 0, %s34
      %s35 = sphi 0, %s32
      %s36 = sphi 0, %s35
      %s52 = sphi 0, %s36
      %s56 = sphi 0, %s56
      %s58 = sphi 0, %s56
      %s59 = sphi 0, %s58
      %s73 = sphi 0, %s59
      %s77 = sphi 0, %s77
      %s79 = sphi 0, %s77
      %s80 = sphi 0, %s79
      %s94 = sphi 0, %s80
      %s100 = sphi 0, %s102
      %s103 = sphi 0, %s100
      %s104 = sphi 0, %s103
      %s120 = sphi 0, %s104
      %s126 = sphi 0, %s128
      %s129 = sphi 0, %s126
      %s130 = sphi 0, %s129
      %s146 = sphi 0, %s130
    $region4: #{tpu_custom_call.1} parent=1 // loop_header_branch
      %25 = sbr.rel (%p23) target = $region8
    $region5: #{tpu_custom_call.1} parent=1 // loop_body
      %s27 = ssub.s32 %s22, 1
      %s28 = ssub.s32 %s22, 2
      %s29 = sadd.s32 %s22, 1
      %s30 = ssub.s32 %s22, %s29
      %p31 = scmp.eq.s32.totalorder %s30, 0
      %s33 = sadd.s32 %s32, 1
      %s34 = scalar_select %p31, %s32, %s33
      %p37 = pneg %p31
      %p38 = scmp.eq.s32.totalorder %s22, 1
      %p39 = por %p37, %p38
      %p40 = scmp.ne.s32.totalorder %s32, %s35
      %p41 = scmp.eq.s32.totalorder %s22, 0
      %p42 = por %p40, %p41
      %p43 = scmp.ne.s32.totalorder %s32, %s35
      %p44 = scmp.eq.s32.totalorder %s27, 1
      %p45 = por %p43, %p44
      %p46 = scmp.ne.s32.totalorder %s35, %s36
      %p47 = scmp.eq.s32.totalorder %s27, 0
      %p48 = por %p46, %p47
      %p49 = scmp.ne.s32.totalorder %s35, %s36
      %p50 = scmp.eq.s32.totalorder %s28, 1
      %p51 = por %p49, %p50
      %p53 = scmp.ne.s32.totalorder %s36, %s52
      %p54 = scmp.eq.s32.totalorder %s28, 0
      %p55 = por %p53, %p54
      %s57 = sadd.s32 %s56, 1
      %p60 = scmp.eq.s32.totalorder %s22, 1
      %p61 = scmp.ne.s32.totalorder %s56, %s58
      %p62 = scmp.eq.s32.totalorder %s22, 0
      %p63 = por %p61, %p62
      %p64 = scmp.ne.s32.totalorder %s56, %s58
      %p65 = scmp.eq.s32.totalorder %s27, 1
      %p66 = por %p64, %p65
      %p67 = scmp.ne.s32.totalorder %s58, %s59
      %p68 = scmp.eq.s32.totalorder %s27, 0
      %p69 = por %p67, %p68
      %p70 = scmp.ne.s32.totalorder %s58, %s59
      %p71 = scmp.eq.s32.totalorder %s28, 1
      %p72 = por %p70, %p71
      %p74 = scmp.ne.s32.totalorder %s59, %s73
      %p75 = scmp.eq.s32.totalorder %s28, 0
      %p76 = por %p74, %p75
      %s78 = sadd.s32 %s77, 1
      %p81 = scmp.eq.s32.totalorder %s22, 1
      %p82 = scmp.ne.s32.totalorder %s77, %s79
      %p83 = scmp.eq.s32.totalorder %s22, 0
      %p84 = por %p82, %p83
      %p85 = scmp.ne.s32.totalorder %s77, %s79
      %p86 = scmp.eq.s32.totalorder %s27, 1
      %p87 = por %p85, %p86
      %p88 = scmp.ne.s32.totalorder %s79, %s80
      %p89 = scmp.eq.s32.totalorder %s27, 0
      %p90 = por %p88, %p89
      %p91 = scmp.ne.s32.totalorder %s79, %s80
      %p92 = scmp.eq.s32.totalorder %s28, 1
      %p93 = por %p91, %p92
      %p95 = scmp.ne.s32.totalorder %s80, %s94
      %p96 = scmp.eq.s32.totalorder %s28, 0
      %p97 = por %p95, %p96
      %s98 = ssub.s32 %s22, %s29
      %p99 = scmp.eq.s32.totalorder %s98, 0
      %s101 = sadd.s32 %s100, 1
      %s102 = scalar_select %p99, %s100, %s101
      %p105 = pneg %p99
      %p106 = scmp.eq.s32.totalorder %s22, 1
      %p107 = por %p105, %p106
      %p108 = scmp.ne.s32.totalorder %s100, %s103
      %p109 = scmp.eq.s32.totalorder %s22, 0
      %p110 = por %p108, %p109
      %p111 = scmp.ne.s32.totalorder %s100, %s103
      %p112 = scmp.eq.s32.totalorder %s27, 1
      %p113 = por %p111, %p112
      %p114 = scmp.ne.s32.totalorder %s103, %s104
      %p115 = scmp.eq.s32.totalorder %s27, 0
      %p116 = por %p114, %p115
      %p117 = scmp.ne.s32.totalorder %s103, %s104
      %p118 = scmp.eq.s32.totalorder %s28, 1
      %p119 = por %p117, %p118
      %p121 = scmp.ne.s32.totalorder %s104, %s120
      %p122 = scmp.eq.s32.totalorder %s28, 0
      %p123 = por %p121, %p122
      %s124 = ssub.s32 %s22, %s29
      %p125 = scmp.eq.s32.totalorder %s124, 0
      %s127 = sadd.s32 %s126, 1
      %s128 = scalar_select %p125, %s126, %s127
      %p131 = pneg %p125
      %p132 = scmp.eq.s32.totalorder %s22, 1
      %p133 = por %p131, %p132
      %p134 = scmp.ne.s32.totalorder %s126, %s129
      %p135 = scmp.eq.s32.totalorder %s22, 0
      %p136 = por %p134, %p135
      %p137 = scmp.ne.s32.totalorder %s126, %s129
      %p138 = scmp.eq.s32.totalorder %s27, 1
      %p139 = por %p137, %p138
      %p140 = scmp.ne.s32.totalorder %s129, %s130
      %p141 = scmp.eq.s32.totalorder %s27, 0
      %p142 = por %p140, %p141
      %p143 = scmp.ne.s32.totalorder %s129, %s130
      %p144 = scmp.eq.s32.totalorder %s28, 1
      %p145 = por %p143, %p144
      %p147 = scmp.ne.s32.totalorder %s130, %s146
      %p148 = scmp.eq.s32.totalorder %s28, 0
      %p149 = por %p147, %p148
      %p150 = scmp.le.s32.totalorder 1, %s22
      %p151 = scmp.lt.s32.totalorder %s22, 3
      %p152 = pnand %p150, %p151
      %p153 = pneg %p152
      // Predicated region
      $region9: #{tpu_custom_call.1} parent=5 // pred_check
        _
      $region10: #{tpu_custom_call.1} parent=5 // pred_check_branch
        %155 = sbr.rel (%p152) target = $region12
      $region11: #{tpu_custom_call.1} parent=5 // pred_region
        %s156 = ssub.s32 %s22, 1
        // Predicated region
        $region13: #{tpu_custom_call.1} parent=11 // pred_check
          %p157 = pneg %p69
        $region14: #{tpu_custom_call.1} parent=11 // pred_check_branch
          %159 = sbr.rel (%p157) target = $region16
        $region15: #{tpu_custom_call.1} parent=11 // pred_region
          %s161 = ssub.s32 32, 32
          %162 = vsyncadd [#allocation7], %s161
          %s164 = sshll.u32 [#allocation6], 4
          %s165 = int_to_ptr.vmem [resolvable:$true] %s164
          %167 = dma.hbm_to_vmem [thread:$0]  %s1, 32, %s165, [#allocation7]
        $region16: #{tpu_custom_call.1} parent=11 // pred_fallthru
          _
        // Predicated region
        $region17: #{tpu_custom_call.1} parent=11 // pred_check
          %p168 = pneg %p90
        $region18: #{tpu_custom_call.1} parent=11 // pred_check_branch
          %170 = sbr.rel (%p168) target = $region20
        $region19: #{tpu_custom_call.1} parent=11 // pred_region
          %s172 = ssub.s32 16, 16
          %173 = vsyncadd [#allocation5], %s172
          %s175 = sshll.u32 %s2, 4
          %s176 = int_to_ptr.vmem [resolvable:$true] %s175
          %178 = dma.vmem_to_smem %s176, 16, [#allocation8], [#allocation5]
        $region20: #{tpu_custom_call.1} parent=11 // pred_fallthru
          _
      $region12: #{tpu_custom_call.1} parent=5 // pred_fallthru
        _
      %p179 = scmp.lt.s32.totalorder %s22, 2
      // Predicated region
      $region21: #{tpu_custom_call.1} parent=5 // pred_check
        %p180 = pneg %p179
      $region22: #{tpu_custom_call.1} parent=5 // pred_check_branch
        %182 = sbr.rel (%p180) target = $region24
      $region23: #{tpu_custom_call.1} parent=5 // pred_region
        // Predicated region
        $region25: #{tpu_custom_call.1} parent=23 // pred_check
          %p183 = pneg %p42
        $region26: #{tpu_custom_call.1} parent=23 // pred_check_branch
          %185 = sbr.rel (%p183) target = $region28
        $region27: #{tpu_custom_call.1} parent=23 // pred_region
          %s186 = sand.u32 %s32, 1
          %s187 = scalar_lea.sflag [#allocation3], %s186
          %s188 = sand.u32 %s32, 1
          %s189 = smul.addr %s188, 8
          %s190 = scalar_lea.vmem [#allocation2], %s189
          %s192 = ssub.s32 128, 128
          %193 = vsyncadd %s187, %s192
          %s194 = smul.addr %s22, 128
          %s195 = scalar_lea.hbm %s0, %s194
          %s197 = sshll.u32 %s190, 4
          %s198 = int_to_ptr.vmem [resolvable:$true] %s197
          %200 = dma.hbm_to_vmem [thread:$0]  %s195, 128, %s198, %s187
        $region28: #{tpu_custom_call.1} parent=23 // pred_fallthru
          _
      $region24: #{tpu_custom_call.1} parent=5 // pred_fallthru
        _
      %p201 = scmp.le.s32.totalorder 1, %s22
      %p202 = scmp.lt.s32.totalorder %s22, 3
      %p203 = pnand %p201, %p202
      %p204 = pneg %p203
      // Predicated region
      $region29: #{tpu_custom_call.1} parent=5 // pred_check
        _
      $region30: #{tpu_custom_call.1} parent=5 // pred_check_branch
        %206 = sbr.rel (%p203) target = $region32
      $region31: #{tpu_custom_call.1} parent=5 // pred_region
        %s207 = ssub.s32 %s22, 1
        %s208 = sand.u32 %s35, 1
        %s209 = scalar_lea.sflag [#allocation3], %s208
        %s210 = sand.u32 %s35, 1
        %s211 = smul.addr %s210, 8
        %s212 = scalar_lea.vmem [#allocation2], %s211
        // Predicated region
        $region33: #{tpu_custom_call.1} parent=31 // pred_check
          %p213 = pneg %p48
        $region34: #{tpu_custom_call.1} parent=31 // pred_check_branch
          %215 = sbr.rel (%p213) target = $region36
        $region35: #{tpu_custom_call.1} parent=31 // pred_region
          %216 = dma.done %s209, 128
        $region36: #{tpu_custom_call.1} parent=31 // pred_fallthru
          _
        // Predicated region
        $region37: #{tpu_custom_call.1} parent=31 // pred_check
          %p217 = pneg %p69
        $region38: #{tpu_custom_call.1} parent=31 // pred_check_branch
          %219 = sbr.rel (%p217) target = $region40
        $region39: #{tpu_custom_call.1} parent=31 // pred_region
          %220 = dma.done [#allocation7], 32
        $region40: #{tpu_custom_call.1} parent=31 // pred_fallthru
          _
        // Predicated region
        $region41: #{tpu_custom_call.1} parent=31 // pred_check
          %p221 = pneg %p90
        $region42: #{tpu_custom_call.1} parent=31 // pred_check_branch
          %223 = sbr.rel (%p221) target = $region44
        $region43: #{tpu_custom_call.1} parent=31 // pred_region
          %224 = dma.done [#allocation5], 16
        $region44: #{tpu_custom_call.1} parent=31 // pred_fallthru
          _
        %225 = sfence
        %s226 = sand.u32 %s35, 1
        %s227 = scalar_lea.sflag [#allocation3], %s226
        %s228 = sand.u32 %s35, 1
        %s229 = smul.addr %s228, 8
        %s230 = scalar_lea.vmem [#allocation2], %s229
        %p231 = pneg %p48
        %p232 = pneg %p45
        %p233 = pneg %p69
        %p234 = pneg %p66
        %p235 = pneg %p90
        %p236 = pneg %p87
        %p237 = pneg %p116
        %p238 = pneg %p113
        %s239 = sand.u32 %s103, 1
        %s240 = scalar_lea.sflag [#allocation4], %s239
        %s241 = sand.u32 %s103, 1
        %s242 = smul.addr %s241, 2
        %s243 = scalar_lea.vmem [#allocation9], %s242
        %p244 = pneg %p142
        %p245 = pneg %p139
        %s246 = sand.u32 %s129, 1
        %s247 = scalar_lea.sflag [#allocation11], %s246
        %s248 = sand.u32 %s129, 1
        %s249 = smul.addr %s248, 2
        %s250 = scalar_lea.vmem [#allocation10], %s249
        %v251 = vld [vmem:[%s212] sm:$0xff]
        %v252 = vld [vmem:[#allocation6] sm:$0x3]
        %vm253 = vcmask 261120
        %v255 = vsel %vm253, %v252, 0
        %v258 = vsel %vm253, %v251, 0
        %260 = vmatprep.subr.mxu0 0.0
        %261 = vmatpush1.xpose.msra.mxu0 0.0
        %262 = vmatprep.subr.mxu0 0.0
        %263 = vmatpush1.xpose.msra.mxu0 0.0
        %264 = vmatprep.subr.mxu0 0.0
        %265 = vmatpush1.xpose.msra.mxu0 0.0
        %266 = vmatprep.subr.mxu0 0.0
        %267 = vmatpush1.xpose.msra.mxu0 0.0
        %268 = vmatprep.subr.mxu0 0.0
        %269 = vmatpush1.xpose.msra.mxu0 0.0
        %270 = vmatprep.subr.mxu0 0.0
        %271 = vmatpush1.xpose.msra.mxu0 0.0
        %272 = vmatprep.subr.mxu0 0.0
        %273 = vmatpush1.xpose.msra.mxu0 0.0
        %274 = vmatprep.subr.mxu0 0.0
        %275 = vmatpush1.xpose.msra.mxu0 0.0
        %276 = vmatprep.subr.mxu0 0.0
        %277 = vmatpush1.xpose.msra.mxu0 0.0
        %278 = vmatprep.subr.mxu0 0.0
        %279 = vmatpush1.xpose.msra.mxu0 0.0
        %280 = vmatprep.subr.mxu0 0.0
        %281 = vmatpush1.xpose.msra.mxu0 0.0
        %282 = vmatprep.subr.mxu0 0.0
        %283 = vmatpush1.xpose.msra.mxu0 0.0
        %284 = vmatprep.subr.mxu0 0.0
        %285 = vmatpush1.xpose.msra.mxu0 0.0
        %286 = vmatprep.subr.mxu0 0.0
        %287 = vmatpush1.xpose.msra.mxu0 0.0
        %288 = vmatprep.subr.mxu0 0.0
        %289 = vmatpush1.xpose.msra.mxu0 0.0
        %290 = vmatprep.subr.mxu0 0.0
        %291 = vmatpush1.xpose.msra.mxu0 %v258
        %292 = vmatprep.subr.mxu0 0.0
        %293 = vmatpush2.xpose.msra.mxu0 0.0
        %294 = vmatprep.subr.mxu0 0.0
        %295 = vmatpush2.xpose.msra.mxu0 0.0
        %296 = vmatprep.subr.mxu0 0.0
        %297 = vmatpush2.xpose.msra.mxu0 0.0
        %298 = vmatprep.subr.mxu0 0.0
        %299 = vmatpush2.xpose.msra.mxu0 0.0
        %300 = vmatprep.subr.mxu0 0.0
        %301 = vmatpush2.xpose.msra.mxu0 0.0
        %302 = vmatprep.subr.mxu0 0.0
        %303 = vmatpush2.xpose.msra.mxu0 0.0
        %304 = vmatprep.subr.mxu0 0.0
        %305 = vmatpush2.xpose.msra.mxu0 0.0
        %306 = vmatprep.subr.mxu0 0.0
        %307 = vmatpush2.xpose.msra.mxu0 0.0
        %308 = vmatprep.subr.mxu0 0.0
        %309 = vmatpush2.xpose.msra.mxu0 0.0
        %310 = vmatprep.subr.mxu0 0.0
        %311 = vmatpush2.xpose.msra.mxu0 0.0
        %312 = vmatprep.subr.mxu0 0.0
        %313 = vmatpush2.xpose.msra.mxu0 0.0
        %314 = vmatprep.subr.mxu0 0.0
        %315 = vmatpush2.xpose.msra.mxu0 0.0
        %316 = vmatprep.subr.mxu0 0.0
        %317 = vmatpush2.xpose.msra.mxu0 0.0
        %318 = vmatprep.subr.mxu0 0.0
        %319 = vmatpush2.xpose.msra.mxu0 0.0
        %320 = vmatprep.subr.mxu0 0.0
        %321 = vmatpush2.xpose.msra.mxu0 0.0
        %322 = vmatprep.subr.mxu0 0.0
        %323 = vmatpush2.xpose.msra.mxu0 0.0
        %324 = vmatprep.mubr.f32.mxu0 0.0
        %325 = vmatmul.mubr.f32.gmra.mxu0 %v255
        %v326 = vpop.f32.mrf.mxu0
        %v327 = vadd.f32 0.0, %v326
        %v328 = vpop.f32.mrf.mxu0
        %329 = vdwg.mxu0
        %s330 = sld [smem:[#allocation8]]
        %v331 = vstv %s330
        %v332 = vadd.f32 %v327, %v331
        %s333 = sld [smem:[#allocation8 + $0x1]]
        %v334 = vstv %s333
        %v335 = vadd.f32 %v327, %v334
        %vm336 = vcmask 57344
        %337 = vst.msk [vmem:[%s250] sm:$0x1] %vm336, %v332
        %vm338 = vcmask 58369
        %339 = vst.msk [vmem:[%s250] sm:$0x2] %vm338, %v335
        %v340 = vsel %vm336, %v332, -inf
        %341 = vmax.xlane.f32.xlu0 %v340
        %v342 = vpop.xlane.xlu0 %341
        %v343 = vsub.f32 %v332, %v342
        %v344 = vmul.f32 %v343, 1.442695
        %v345 = vpow.pop %v344
        %v346 = vsel %vm336, %v345, 0.0
        %347 = vadd.xlane.f32.xlu0 %v346
        %v348 = vpop.xlane.xlu0 %347
        %v349 = vlog2.pop %v348
        %v350 = vmul.f32 %v349, 0.6931472
        %v351 = vsub.f32 %v343, %v350
        %352 = vst.msk [vmem:[%s243] sm:$0x1] %vm336, %v351
        %v353 = vsel %vm338, %v335, -inf
        %354 = vmax.xlane.f32.xlu0 %v353
        %v355 = vpop.xlane.xlu0 %354
        %v356 = vsub.f32 %v335, %v355
        %v357 = vmul.f32 %v356, 1.442695
        %v358 = vpow.pop %v357
        %v359 = vsel %vm338, %v358, 0.0
        %360 = vadd.xlane.f32.xlu0 %v359
        %v361 = vpop.xlane.xlu0 %360
        %v362 = vlog2.pop %v361
        %v363 = vmul.f32 %v362, 0.6931472
        %v364 = vsub.f32 %v356, %v363
        %365 = vst.msk [vmem:[%s243] sm:$0x2] %vm338, %v364
        %s366 = sand.u32 %s103, 1
        %s367 = scalar_lea.sflag [#allocation4], %s366
        %s368 = sand.u32 %s103, 1
        %s369 = smul.addr %s368, 2
        %s370 = scalar_lea.vmem [#allocation9], %s369
        %s371 = sand.u32 %s129, 1
        %s372 = scalar_lea.sflag [#allocation11], %s371
        %s373 = sand.u32 %s129, 1
        %s374 = smul.addr %s373, 2
        %s375 = scalar_lea.vmem [#allocation10], %s374
        // Predicated region
        $region45: #{tpu_custom_call.1} parent=31 // pred_check
          %p376 = pneg %p113
        $region46: #{tpu_custom_call.1} parent=31 // pred_check_branch
          %378 = sbr.rel (%p376) target = $region48
        $region47: #{tpu_custom_call.1} parent=31 // pred_region
          %s380 = ssub.s32 32, 32
          %381 = vsyncadd %s367, %s380
          %s382 = smul.addr %s27, 32
          %s383 = scalar_lea.hbm %s3, %s382
          %s385 = sshll.u32 %s370, 4
          %s386 = int_to_ptr.vmem [resolvable:$true] %s385
          %388 = dma.vmem_to_hbm [thread:$0]  %s386, 32, %s383, %s367
        $region48: #{tpu_custom_call.1} parent=31 // pred_fallthru
          _
        // Predicated region
        $region49: #{tpu_custom_call.1} parent=31 // pred_check
          %p389 = pneg %p139
        $region50: #{tpu_custom_call.1} parent=31 // pred_check_branch
          %391 = sbr.rel (%p389) target = $region52
        $region51: #{tpu_custom_call.1} parent=31 // pred_region
          %s393 = ssub.s32 32, 32
          %394 = vsyncadd %s372, %s393
          %s395 = smul.addr %s27, 32
          %s396 = scalar_lea.hbm %s4, %s395
          %s398 = sshll.u32 %s375, 4
          %s399 = int_to_ptr.vmem [resolvable:$true] %s398
          %401 = dma.vmem_to_hbm [thread:$0]  %s399, 32, %s396, %s372
        $region52: #{tpu_custom_call.1} parent=31 // pred_fallthru
          _
      $region32: #{tpu_custom_call.1} parent=5 // pred_fallthru
        _
      %p402 = scmp.le.s32.totalorder 2, %s22
      // Predicated region
      $region53: #{tpu_custom_call.1} parent=5 // pred_check
        %p403 = pneg %p402
      $region54: #{tpu_custom_call.1} parent=5 // pred_check_branch
        %405 = sbr.rel (%p403) target = $region56
      $region55: #{tpu_custom_call.1} parent=5 // pred_region
        %s406 = ssub.s32 %s22, 2
        // Predicated region
        $region57: #{tpu_custom_call.1} parent=55 // pred_check
          %p407 = pneg %p119
        $region58: #{tpu_custom_call.1} parent=55 // pred_check_branch
          %409 = sbr.rel (%p407) target = $region60
        $region59: #{tpu_custom_call.1} parent=55 // pred_region
          %s410 = sand.u32 %s104, 1
          %s411 = scalar_lea.sflag [#allocation4], %s410
          %s412 = sand.u32 %s104, 1
          %s413 = smul.addr %s412, 2
          %s414 = scalar_lea.vmem [#allocation9], %s413
          %415 = dma.done %s411, 32
        $region60: #{tpu_custom_call.1} parent=55 // pred_fallthru
          _
        // Predicated region
        $region61: #{tpu_custom_call.1} parent=55 // pred_check
          %p416 = pneg %p145
        $region62: #{tpu_custom_call.1} parent=55 // pred_check_branch
          %418 = sbr.rel (%p416) target = $region64
        $region63: #{tpu_custom_call.1} parent=55 // pred_region
          %s419 = sand.u32 %s130, 1
          %s420 = scalar_lea.sflag [#allocation11], %s419
          %s421 = sand.u32 %s130, 1
          %s422 = smul.addr %s421, 2
          %s423 = scalar_lea.vmem [#allocation10], %s422
          %424 = dma.done %s420, 32
        $region64: #{tpu_custom_call.1} parent=55 // pred_fallthru
          _
      $region56: #{tpu_custom_call.1} parent=5 // pred_fallthru
        _
    $region6: #{tpu_custom_call.1} parent=1 // loop_footer
      %s26 = sadd.s32 1, %s22
    $region7: #{tpu_custom_call.1} parent=1 // loop_footer_branch
      %21 = sbr.rel target = $region3
    $region8: #{tpu_custom_call.1} parent=1 // loop_exit
      _
    %425 = vsyncpa [#allocation3], 1
    %s426 = scalar_lea.sflag [#allocation3], 1
    %427 = vsyncpa %s426, 1
    %428 = vsyncpa [#allocation7], 1
    %429 = vsyncpa [#allocation4], 1
    %s430 = scalar_lea.sflag [#allocation4], 1
    %431 = vsyncpa %s430, 1
    %432 = vsyncpa [#allocation11], 1
    %s433 = scalar_lea.sflag [#allocation11], 1
    %434 = vsyncpa %s433, 1
    %435 = vsyncpa [#allocation5], 1
    %s436 = scalar_lea.sflag [#allocation5], 1
    %437 = vsyncpa %s436, 1

</llo_original>
